<compile_context>
chip_gen: v6e
topology: v6e:2x2x1
jax: 0.10.0
libtpu: 0.0.40
codegen_flags: <defaults>
</compile_context>

<pallas_src>
import jax
import jax.numpy as jnp
from jax.experimental import pallas as pl
from jax.experimental.pallas import tpu as pltpu


MAX_TM = 2048  # row-tile cap (multiple of 8)


def _round_up(x, m):
    return ((x + m - 1) // m) * m


def _vmem_budgets():
    """Generation-aware VMEM limits: (vmem_limit_bytes, tile_budget_bytes)."""
    cap = 64 * 1024 * 1024  # v7x-safe fallback
    try:
        info = pltpu.get_tpu_info()
        cap = int(getattr(info, "vmem_capacity_bytes", cap)) or cap
    except Exception:
        pass
    limit = min((cap * 3) // 4, 100 * 1024 * 1024)   # 96 MiB on 128 MiB parts, 48 MiB on v7x
    budget = (limit * 4) // 5                         # headroom for compiler scratch
    return int(limit), int(budget)


# ---------------------------------------------------------------------------
# Kernels
# ---------------------------------------------------------------------------

def _kernel_fused(h_ref, self_h_ref, self_h_tmp_ref, norm_ref,
                  w_ref, b_ref, out_ref):
    # f32 elementwise (v5e-safe; avoids cancellation error in the difference).
    hh = (h_ref[...] - self_h_tmp_ref[...]) * norm_ref[...]          # [tm, D]
    # Single K=2D MXU matmul on the lane-concatenated operand.
    x = jnp.concatenate(
        [self_h_ref[...].astype(jnp.bfloat16), hh.astype(jnp.bfloat16)], axis=1)
    y = jnp.dot(x, w_ref[...], preferred_element_type=jnp.float32)   # [tm, tn]
    y = y + b_ref[...]                                               # [1, tn] bcast
    out_ref[...] = jnp.maximum(y, 0.0).astype(out_ref.dtype)         # ReLU


def _kernel_split(h_ref, self_h_ref, self_h_tmp_ref, norm_ref,
                  w1_ref, w2_ref, b_ref, out_ref):
    hh = (h_ref[...] - self_h_tmp_ref[...]) * norm_ref[...]
    y = jnp.dot(self_h_ref[...].astype(jnp.bfloat16), w1_ref[...],
                preferred_element_type=jnp.float32)
    y = y + jnp.dot(hh.astype(jnp.bfloat16), w2_ref[...],
                    preferred_element_type=jnp.float32)
    y = y + b_ref[...]
    out_ref[...] = jnp.maximum(y, 0.0).astype(out_ref.dtype)


# ---------------------------------------------------------------------------
# One-time parameter preparation (hoisted out of the per-call path)
# ---------------------------------------------------------------------------

def prepare_node_update_params(weight, bias, *, tn=None):
    """weight: [out_dim, in_dim] (PyTorch Linear layout), bias: [out_dim].

    Returns a dict with bf16 weight tensors (whole [2D, out_p] when D < 128,
    split halves otherwise), f32 [1, out_p] bias, and tiling metadata.
    out_p = round_up(out_dim, 128); tn is a multiple-of-128 divisor of out_p.
    """
    out_dim, in_dim = weight.shape
    assert in_dim % 2 == 0, "Linear in_dim must equal 2*feature_dim (concat)"
    d = in_dim // 2
    out_p = _round_up(out_dim, 128)
    _, tile_budget = _vmem_budgets()

    # tn: divisor of out_p (no re-rounding of out_p).  Prefer tn = out_p
    # (single column block, weight fetched once, single-buffered).
    w_budget = tile_budget // 3
    if tn is None:
        if 2 * d * out_p * 2 <= w_budget:                 # single-buffered whole weight
            tn = out_p
        else:
            nb = out_p // 128
            tn = 128
            for k in range(1, nb):
                if nb % k == 0:
                    cand = k * 128
                    if 2 * (2 * d * cand * 2) <= w_budget:   # double-buffered block
                        tn = cand
    assert out_p % tn == 0 and tn % 128 == 0

    pad = out_p - out_dim
    wt = jnp.pad(weight.T.astype(jnp.bfloat16), ((0, 0), (0, pad)))   # [2D, out_p]
    fuse = d < 128
    if fuse:
        weights = (wt,)                                   # single K=2D operand
    else:
        weights = (wt[:d, :], wt[d:, :])                  # self_h half / normalized half
    b2d = jnp.pad(bias.astype(jnp.float32), (0, pad)).reshape(1, out_p)

    return {"weights": weights, "bias": b2d, "out_dim": out_dim,
            "out_p": out_p, "tn": tn, "d": d, "fuse": fuse}


def _choose_tm(n, d, tn, tile_budget, w_bytes, out_itemsize):
    d_pad = _round_up(d, 128)
    # Double-buffered, lane-padded per-row footprint:
    #   3x f32 [tm, d_pad] activations + f32 [tm, 128] norm + [tm, tn] output.
    per_row = 2 * ((3 * d_pad + 128) * 4 + tn * out_itemsize)
    tm = (tile_budget - w_bytes) // per_row
    tm = max(8, min(tm, MAX_TM, _round_up(n, 8)))
    return max(8, (tm // 8) * 8)


# ---------------------------------------------------------------------------
# Forward pass
# ---------------------------------------------------------------------------

def node_update(h, self_h, self_h_tmp, norm, params, *, tm=None, out_dtype=None):
    """Forward pass.  params comes from prepare_node_update_params()."""
    n, d = h.shape
    assert d == params["d"]
    weights = params["weights"]
    b2d = params["bias"]
    out_dim, out_p, tn = params["out_dim"], params["out_p"], params["tn"]
    fuse = params["fuse"]
    if out_dtype is None:
        out_dtype = h.dtype

    vmem_limit, tile_budget = _vmem_budgets()
    n_col = out_p // tn
    n_wbuf = 1 if n_col == 1 else 2
    w_bytes = n_wbuf * (2 * d * tn * 2 + 128 * 4)   # bf16 weight block(s) + f32 bias row
    if tm is None:
        tm = _choose_tm(n, d, tn, tile_budget, w_bytes, jnp.dtype(out_dtype).itemsize)
    assert tm % 8 == 0

    # Rows outer (activations streamed once), columns inner (weights re-streamed).
    grid = (pl.cdiv(n, tm), n_col)

    row_spec = pl.BlockSpec((tm, d), lambda i, j: (i, 0))
    norm_spec = pl.BlockSpec((tm, 1), lambda i, j: (i, 0))

    # Weight/bias block index is constant when n_col == 1 -> single buffer;
    # otherwise it changes every inner step -> default double buffering.
    if n_col == 1:
        def wspec(rows):
            return pl.BlockSpec((rows, tn), lambda i, j: (0, j),
                                pipeline_mode=pl.Buffered(1))
    else:
        def wspec(rows):
            return pl.BlockSpec((rows, tn), lambda i, j: (0, j))
    w_specs = [wspec(w.shape[0]) for w in weights]
    b_spec = wspec(1)

    kernel = _kernel_fused if fuse else _kernel_split

    out = pl.pallas_call(
        kernel,
        out_shape=jax.ShapeDtypeStruct((n, out_p), out_dtype),
        grid_spec=pltpu.PrefetchScalarGridSpec(
            num_scalar_prefetch=0,
            grid=grid,
            in_specs=[row_spec,      # h
                      row_spec,      # self_h
                      row_spec,      # self_h_tmp
                      norm_spec,     # norm / subg_norm
                      *w_specs,      # weight(s)
                      b_spec],       # bias
            out_specs=pl.BlockSpec((tm, tn), lambda i, j: (i, j)),
        ),
        compiler_params=pltpu.CompilerParams(
            dimension_semantics=("parallel", "parallel"),
            vmem_limit_bytes=vmem_limit),
    )(h, self_h, self_h_tmp, norm, *weights, b2d)

    if out_p != out_dim:
        out = out[:, :out_dim]   # no-op when out_dim % 128 == 0
    return out


# ---------------------------------------------------------------------------
# Reference + tests
# ---------------------------------------------------------------------------

def node_update_ref(h, self_h, self_h_tmp, norm, weight, bias):
    hh = (h - self_h_tmp) * norm
    x = jnp.concatenate([self_h, hh], axis=1)
    return jax.nn.relu(x @ weight.T + bias)


def _run_case(key, n, d, out_dim, tm=None):
    in_dim = 2 * d
    k = jax.random.split(key, 6)
    h = jax.random.normal(k[0], (n, d), dtype=jnp.float32)
    self_h = jax.random.normal(k[1], (n, d), dtype=jnp.float32)
    self_h_tmp = jax.random.normal(k[2], (n, d), dtype=jnp.float32)
    # norm / subg_norm: per-node scalar degree normalization.
    norm = jax.random.uniform(k[3], (n, 1), dtype=jnp.float32,
                              minval=0.1, maxval=1.0)
    weight = jax.random.normal(k[4], (out_dim, in_dim), dtype=jnp.float32) * 0.1
    bias = jax.random.normal(k[5], (out_dim,), dtype=jnp.float32) * 0.1

    # One-time parameter prep (cached alongside the module parameters).
    params = prepare_node_update_params(weight, bias)

    out = node_update(h, self_h, self_h_tmp, norm, params, tm=tm)
    out = jax.block_until_ready(out)

    ref = node_update_ref(h, self_h, self_h_tmp, norm, weight, bias)
    assert out.shape == (n, out_dim)
    # bf16 MXU operands (f32 accumulation) vs full-f32 reference.
    assert jnp.allclose(out, ref, atol=3e-2, rtol=3e-2), "mismatch vs reference"


if __name__ == "__main__":
    key = jax.random.PRNGKey(0)
    k1, k2 = jax.random.split(key)

    # Small module-consistent shapes (in_dim = 2*D): out_dim=32 -> out_p=128.
    _run_case(k1, n=8, d=16, out_dim=32)

    # Larger case: ragged N (600 % 256 != 0, masked tail block), out_dim=640
    # is already a multiple of 128 so tn=out_p, single column block, no
    # padding or slicing copies around the kernel.
    _run_case(k2, n=600, d=64, out_dim=640, tm=256)

    print("KERNEL_OK")
</pallas_src>

<mosaic_0001>
module attributes {stable_mosaic.version = 11 : i64} {
  func.func @_kernel_fused(%arg0: i32, %arg1: i32, %arg2: memref<8x16xf32, #tpu.memory_space<vmem>>, %arg3: memref<8x16xf32, #tpu.memory_space<vmem>>, %arg4: memref<8x16xf32, #tpu.memory_space<vmem>>, %arg5: memref<8x1xf32, #tpu.memory_space<vmem>>, %arg6: memref<32x128xbf16, #tpu.memory_space<vmem>>, %arg7: memref<1x128xf32, #tpu.memory_space<vmem>>, %arg8: memref<8x128xf32, #tpu.memory_space<vmem>>) attributes {dimension_semantics = [#tpu.dimension_semantics<parallel>, #tpu.dimension_semantics<parallel>], iteration_bounds = array<i64: 1, 1>, scalar_prefetch = 0 : i64, scratch_operands = 0 : i64, tpu.core_type = #tpu.core_type<tc>, window_params = [{transform_indices = @transform_0, window_bounds = array<i64: 8, 16>}, {transform_indices = @transform_1, window_bounds = array<i64: 8, 16>}, {transform_indices = @transform_2, window_bounds = array<i64: 8, 16>}, {transform_indices = @transform_3, window_bounds = array<i64: 8, 1>}, {pipeline_mode = #tpu.pipeline_mode<synchronous>, transform_indices = @transform_4, window_bounds = array<i64: 32, 128>}, {pipeline_mode = #tpu.pipeline_mode<synchronous>, transform_indices = @transform_5, window_bounds = array<i64: 1, 128>}, {transform_indices = @transform_6, window_bounds = array<i64: 8, 128>}]} {
    %c0 = arith.constant 0 : index
    %c0_0 = arith.constant 0 : index
    %0 = vector.load %arg2[%c0, %c0_0] : memref<8x16xf32, #tpu.memory_space<vmem>>, vector<8x16xf32>
    %c0_1 = arith.constant 0 : index
    %c0_2 = arith.constant 0 : index
    %1 = vector.load %arg4[%c0_1, %c0_2] : memref<8x16xf32, #tpu.memory_space<vmem>>, vector<8x16xf32>
    %2 = arith.subf %0, %1 : vector<8x16xf32>
    %c0_3 = arith.constant 0 : index
    %c0_4 = arith.constant 0 : index
    %3 = vector.load %arg5[%c0_3, %c0_4] : memref<8x1xf32, #tpu.memory_space<vmem>>, vector<8x1xf32>
    %4 = vector.broadcast %3 : vector<8x1xf32> to vector<8x16xf32>
    %5 = arith.mulf %2, %4 : vector<8x16xf32>
    %c0_5 = arith.constant 0 : index
    %c0_6 = arith.constant 0 : index
    %6 = vector.load %arg3[%c0_5, %c0_6] : memref<8x16xf32, #tpu.memory_space<vmem>>, vector<8x16xf32>
    %7 = arith.truncf %6 : vector<8x16xf32> to vector<8x16xbf16>
    %8 = arith.truncf %5 : vector<8x16xf32> to vector<8x16xbf16>
    %9 = tpu.concatenate %7, %8 in 1 : vector<8x16xbf16>, vector<8x16xbf16> -> vector<8x32xbf16>
    %c0_7 = arith.constant 0 : index
    %c0_8 = arith.constant 0 : index
    %10 = vector.load %arg6[%c0_7, %c0_8] : memref<32x128xbf16, #tpu.memory_space<vmem>>, vector<32x128xbf16>
    %cst = arith.constant dense<0.000000e+00> : vector<8x128xf32>
    %11 = tpu.matmul %9, %10, %cst {dimension_numbers = #tpu.dot_dimension_numbers<[1], [0], [0], [1], [0, 0, 1, 1], [], []>} : vector<8x32xbf16>, vector<32x128xbf16>, vector<8x128xf32> -> vector<8x128xf32>
    %c0_9 = arith.constant 0 : index
    %c0_10 = arith.constant 0 : index
    %12 = vector.load %arg7[%c0_9, %c0_10] : memref<1x128xf32, #tpu.memory_space<vmem>>, vector<1x128xf32>
    %13 = vector.broadcast %12 : vector<1x128xf32> to vector<8x128xf32>
    %14 = arith.addf %11, %13 : vector<8x128xf32>
    %cst_11 = arith.constant 0.000000e+00 : f32
    %15 = vector.broadcast %cst_11 : f32 to vector<8x128xf32>
    %16 = arith.maximumf %14, %15 : vector<8x128xf32>
    %c0_12 = arith.constant 0 : index
    %c0_13 = arith.constant 0 : index
    %17 = vector.load %arg8[%c0_12, %c0_13] : memref<8x128xf32, #tpu.memory_space<vmem>>, vector<8x128xf32>
    tpu.vector_store %arg8[%c0_12, %c0_13], %16 {strides = array<i32>} : memref<8x128xf32, #tpu.memory_space<vmem>>, vector<8x128xf32>,
    return
  }
  func.func @transform_0(%arg0: i32, %arg1: i32) -> (i32, i32) {
    %c0_i32 = arith.constant 0 : i32
    %c0_i32_0 = arith.constant 0 : i32
    return %arg0, %c0_i32 : i32, i32
  }
  func.func @transform_1(%arg0: i32, %arg1: i32) -> (i32, i32) {
    %c0_i32 = arith.constant 0 : i32
    %c0_i32_0 = arith.constant 0 : i32
    return %arg0, %c0_i32 : i32, i32
  }
  func.func @transform_2(%arg0: i32, %arg1: i32) -> (i32, i32) {
    %c0_i32 = arith.constant 0 : i32
    %c0_i32_0 = arith.constant 0 : i32
    return %arg0, %c0_i32 : i32, i32
  }
  func.func @transform_3(%arg0: i32, %arg1: i32) -> (i32, i32) {
    %c0_i32 = arith.constant 0 : i32
    %c0_i32_0 = arith.constant 0 : i32
    return %arg0, %c0_i32 : i32, i32
  }
  func.func @transform_4(%arg0: i32, %arg1: i32) -> (i32, i32) {
    %c0_i32 = arith.constant 0 : i32
    %c0_i32_0 = arith.constant 0 : i32
    return %c0_i32, %arg1 : i32, i32
  }
  func.func @transform_5(%arg0: i32, %arg1: i32) -> (i32, i32) {
    %c0_i32 = arith.constant 0 : i32
    %c0_i32_0 = arith.constant 0 : i32
    return %c0_i32, %arg1 : i32, i32
  }
  func.func @transform_6(%arg0: i32, %arg1: i32) -> (i32, i32) {
    %c0_i32 = arith.constant 0 : i32
    return %arg0, %arg1 : i32, i32
  }
}

</mosaic_0001>

<llo_original>
// kernel: tpu_custom_call.1
$region0: #{tpu_custom_call.1}
  #allocation0 [shape = 'u32[]', space=smem, size = 0x4, offset = 0x4, fixed_abs, tag = 'smem constant byte address 0x4 - core index']
  #allocation1 [shape = 'u32[144,128]{1,0:T(1,128)}', space=vmem, size = 0x12000, scoped, tag = 'internal scratch']
  %s0 = inlined_call_operand.hbm [shape: f32[8,16], index: 0, kind: input, shape index: {}]
  %s1 = inlined_call_operand.hbm [shape: f32[8,16], index: 1, kind: input, shape index: {}]
  %s2 = inlined_call_operand.hbm [shape: f32[8,16], index: 2, kind: input, shape index: {}]
  %s3 = inlined_call_operand.vmem [shape: f32[8,1], index: 3, kind: input, shape index: {}]
  %s4 = inlined_call_operand.vmem [shape: bf16[32,128], index: 4, kind: input, shape index: {}]
  %s5 = inlined_call_operand.vmem [shape: f32[1,128], index: 5, kind: input, shape index: {}]
  %s6 = inlined_call_operand.hbm [shape: f32[8,128], index: 6, kind: output, shape index: {}]
  %s7 = sld [smem:[#allocation0]]
  $region46: #{tpu_custom_call.1} parent=0
    _
  %s9 = ssub.s32 1, %s7
  %s10 = scalar_select 0, %s9, %s7
  $region1: #{tpu_custom_call.1} parent=0
    #allocation2 [shape = 'u8[4096]{0}', space=vmem, size = 0x1000, scoped, tag = 'input window, operand 0, single buffered']
    #allocation3 [shape = 's32[1]{0}', space=sflag, size = 0x4, scoped, tag = 'scoped memory for tpu_custom_call.1']
    #allocation4 [shape = 's32[1]{0}', space=sflag, size = 0x4, scoped, tag = 'scoped memory for tpu_custom_call.1']
    #allocation5 [shape = 'u8[4096]{0}', space=vmem, size = 0x1000, scoped, tag = 'input window, operand 1, single buffered']
    #allocation6 [shape = 's32[1]{0}', space=sflag, size = 0x4, scoped, tag = 'scoped memory for tpu_custom_call.1']
    #allocation7 [shape = 'u8[4096]{0}', space=vmem, size = 0x1000, scoped, tag = 'input window, operand 2, single buffered']
    #allocation8 [shape = 'u8[4096]{0}', space=vmem, size = 0x1000, scoped, tag = 'output window, operand 0, single buffered']
    %11 = vsyncpa [#allocation3], 0
    %12 = vsyncpa [#allocation6], 0
    %13 = vsyncpa [#allocation4], 0
    // Predicated region
    $region2: #{tpu_custom_call.1} parent=1 // pred_check
      _
    $region3: #{tpu_custom_call.1} parent=1 // pred_check_branch
      %15 = sbr.rel (0) target = $region5
    $region4: #{tpu_custom_call.1} parent=1 // pred_region
      %s17 = ssub.s32 128, 128
      %18 = vsyncadd [#allocation3], %s17
      %s20 = sshll.u32 [#allocation2], 4
      %s21 = int_to_ptr.vmem [resolvable:$true] %s20
      %23 = dma.hbm_to_vmem [thread:$0]  %s0, 128, %s21, [#allocation3]
    $region5: #{tpu_custom_call.1} parent=1 // pred_fallthru
      _
    // Predicated region
    $region6: #{tpu_custom_call.1} parent=1 // pred_check
      _
    $region7: #{tpu_custom_call.1} parent=1 // pred_check_branch
      %25 = sbr.rel (0) target = $region9
    $region8: #{tpu_custom_call.1} parent=1 // pred_region
      %s27 = ssub.s32 128, 128
      %28 = vsyncadd [#allocation6], %s27
      %s30 = sshll.u32 [#allocation5], 4
      %s31 = int_to_ptr.vmem [resolvable:$true] %s30
      %33 = dma.hbm_to_vmem [thread:$0]  %s1, 128, %s31, [#allocation6]
    $region9: #{tpu_custom_call.1} parent=1 // pred_fallthru
      _
    // Predicated region
    $region10: #{tpu_custom_call.1} parent=1 // pred_check
      _
    $region11: #{tpu_custom_call.1} parent=1 // pred_check_branch
      %35 = sbr.rel (0) target = $region13
    $region12: #{tpu_custom_call.1} parent=1 // pred_region
      %s37 = ssub.s32 128, 128
      %38 = vsyncadd [#allocation6], %s37
      %s40 = sshll.u32 [#allocation7], 4
      %s41 = int_to_ptr.vmem [resolvable:$true] %s40
      %43 = dma.hbm_to_vmem [thread:$0]  %s2, 128, %s41, [#allocation6]
    $region13: #{tpu_custom_call.1} parent=1 // pred_fallthru
      _
    // Predicated region
    $region14: #{tpu_custom_call.1} parent=1 // pred_check
      _
    $region15: #{tpu_custom_call.1} parent=1 // pred_check_branch
      %45 = sbr.rel (0) target = $region17
    $region16: #{tpu_custom_call.1} parent=1 // pred_region
      _
    $region17: #{tpu_custom_call.1} parent=1 // pred_fallthru
      _
    // Predicated region
    $region18: #{tpu_custom_call.1} parent=1 // pred_check
      _
    $region19: #{tpu_custom_call.1} parent=1 // pred_check_branch
      %47 = sbr.rel (0) target = $region21
    $region20: #{tpu_custom_call.1} parent=1 // pred_region
      _
    $region21: #{tpu_custom_call.1} parent=1 // pred_fallthru
      _
    // Predicated region
    $region22: #{tpu_custom_call.1} parent=1 // pred_check
      _
    $region23: #{tpu_custom_call.1} parent=1 // pred_check_branch
      %49 = sbr.rel (0) target = $region25
    $region24: #{tpu_custom_call.1} parent=1 // pred_region
      _
    $region25: #{tpu_custom_call.1} parent=1 // pred_fallthru
      _
    // Predicated region
    $region26: #{tpu_custom_call.1} parent=1 // pred_check
      _
    $region27: #{tpu_custom_call.1} parent=1 // pred_check_branch
      %51 = sbr.rel (0) target = $region29
    $region28: #{tpu_custom_call.1} parent=1 // pred_region
      %52 = dma.done [#allocation3], 128
    $region29: #{tpu_custom_call.1} parent=1 // pred_fallthru
      _
    // Predicated region
    $region30: #{tpu_custom_call.1} parent=1 // pred_check
      _
    $region31: #{tpu_custom_call.1} parent=1 // pred_check_branch
      %54 = sbr.rel (0) target = $region33
    $region32: #{tpu_custom_call.1} parent=1 // pred_region
      %55 = dma.done [#allocation6], 128
    $region33: #{tpu_custom_call.1} parent=1 // pred_fallthru
      _
    // Predicated region
    $region34: #{tpu_custom_call.1} parent=1 // pred_check
      _
    $region35: #{tpu_custom_call.1} parent=1 // pred_check_branch
      %57 = sbr.rel (0) target = $region37
    $region36: #{tpu_custom_call.1} parent=1 // pred_region
      %58 = dma.done [#allocation6], 128
    $region37: #{tpu_custom_call.1} parent=1 // pred_fallthru
      _
    %v60 = vld [vmem:[#allocation2] sm:$0xff]
    %v61 = vld [vmem:[#allocation7] sm:$0xff]
    %v62 = vsub.f32 %v60, %v61
    %v63 = vld [vmem:[%s3] sm:$0xff]
    %65 = vset.pattern.permute.xlu0 0
    %66 = vperm.xlu0 %65, %v63
    %v67 = vpop.permute.xlu0 %66
    %v69 = vmul.f32 %v62, %v67
    %v70 = vld [vmem:[#allocation5] sm:$0xff]
    %v71 = vpack.c.bf16 %v70, %v70
    %v72 = vpack.c.bf16 %v69, %v69
    %74 = vrot.lane.b32.xlu0 %v72, 16
    %v75 = vpop.permute.xlu0 %74
    %vm76 = vcmask 130048
    %v79 = vsel %vm76, %v71, %v75
    %v80 = vld [vmem:[%s4] sm:$0xf]
    %v81 = vld [vmem:[%s4 + $0x4] sm:$0xf]
    %v82 = vld [vmem:[%s4 + $0x8] sm:$0xf]
    %v83 = vld [vmem:[%s4 + $0xc] sm:$0xf]
    %v84 = vld [vmem:[%s5] sm:$0x1]
    %v86 = vlaneseq
    %v87 = vshrl.u32 %v86, 7
    %v88 = vsub.s32 0, %v87
    %v89 = vrot.slane %v84, %v88
    %v95 = vunpack.c.l.b16 %v80
    %v96 = vunpack.c.l.b16 %v81
    %v97 = vunpack.c.l.b16 %v82
    %v98 = vunpack.c.l.b16 %v83
    %v99 = vpack.c.b16 %v96, %v95
    %v100 = vpack.c.b16 %v98, %v97
    %vm103 = vcmask 261120
    %v104 = vsel %vm103, %v79, 0
    %106 = vmatprep.subr.bf16.mxu0 0
    %107 = vmatpush1.bf16.msra.mxu0 0
    %108 = vmatprep.subr.bf16.mxu0 0
    %109 = vmatpush1.bf16.msra.mxu0 0
    %110 = vmatprep.subr.bf16.mxu0 0
    %111 = vmatpush1.bf16.msra.mxu0 0
    %112 = vmatprep.subr.bf16.mxu0 0
    %113 = vmatpush1.bf16.msra.mxu0 0
    %114 = vmatprep.subr.bf16.mxu0 0
    %115 = vmatpush1.bf16.msra.mxu0 0
    %116 = vmatprep.subr.bf16.mxu0 0
    %117 = vmatpush1.bf16.msra.mxu0 0
    %118 = vmatprep.subr.bf16.mxu0 0
    %119 = vmatpush1.bf16.msra.mxu0 %v100
    %120 = vmatprep.subr.bf16.mxu0 0
    %121 = vmatpush1.bf16.msra.mxu0 %v99
    %122 = vmatprep.subr.bf16.mxu0 0
    %123 = vmatpush2.bf16.msra.mxu0 0
    %124 = vmatprep.subr.bf16.mxu0 0
    %125 = vmatpush2.bf16.msra.mxu0 0
    %126 = vmatprep.subr.bf16.mxu0 0
    %127 = vmatpush2.bf16.msra.mxu0 0
    %128 = vmatprep.subr.bf16.mxu0 0
    %129 = vmatpush2.bf16.msra.mxu0 0
    %130 = vmatprep.subr.bf16.mxu0 0
    %131 = vmatpush2.bf16.msra.mxu0 0
    %132 = vmatprep.subr.bf16.mxu0 0
    %133 = vmatpush2.bf16.msra.mxu0 0
    %134 = vmatprep.subr.bf16.mxu0 0
    %135 = vmatpush2.bf16.msra.mxu0 0
    %136 = vmatprep.subr.bf16.mxu0 0
    %137 = vmatpush2.bf16.msra.mxu0 0
    %138 = vmatprep.mubr.bf16.mxu0 0
    %139 = vmatmul.mubr.bf16.gmra.mxu0 %v104
    %v140 = vpop.f32.mrf.mxu0
    %v141 = vadd.f32 %v89, %v140
    %v142 = vpop.f32.mrf.mxu0
    %v143 = vpop.f32.mrf.mxu0
    %v144 = vpop.f32.mrf.mxu0
    %145 = vdwg.mxu0
    %v146 = vmax.f32 %v141, 0.0
    %147 = vst [vmem:[#allocation8] sm:$0xff] %v146
    // Predicated region
    $region38: #{tpu_custom_call.1} parent=1 // pred_check
      _
    $region39: #{tpu_custom_call.1} parent=1 // pred_check_branch
      %149 = sbr.rel (0) target = $region41
    $region40: #{tpu_custom_call.1} parent=1 // pred_region
      %s151 = ssub.s32 128, 128
      %152 = vsyncadd [#allocation4], %s151
      %s154 = sshll.u32 [#allocation8], 4
      %s155 = int_to_ptr.vmem [resolvable:$true] %s154
      %157 = dma.vmem_to_hbm [thread:$0]  %s155, 128, %s6, [#allocation4]
    $region41: #{tpu_custom_call.1} parent=1 // pred_fallthru
      _
    // Predicated region
    $region42: #{tpu_custom_call.1} parent=1 // pred_check
      _
    $region43: #{tpu_custom_call.1} parent=1 // pred_check_branch
      %159 = sbr.rel (0) target = $region45
    $region44: #{tpu_custom_call.1} parent=1 // pred_region
      %160 = dma.done [#allocation4], 128
    $region45: #{tpu_custom_call.1} parent=1 // pred_fallthru
      _
    %161 = vsyncpa [#allocation3], 1
    %162 = vsyncpa [#allocation6], 1
    %163 = vsyncpa [#allocation4], 1

</llo_original>
